<compile_context>
chip_gen: v7x
topology: tpu7x:2x2x1
jax: 0.10.0
libtpu: 0.0.40
codegen_flags: <defaults>
</compile_context>

<pallas_src>
import jax
import jax.numpy as jnp
from jax import lax
from jax.experimental import pallas as pl
from jax.experimental.pallas import tpu as pltpu


def mlp_kernel(x_ref, w1_ref, b1_ref, w2_ref, b2_ref, w3_ref, b3_ref, o_ref):
    # x_ref: [TILE_B, D] float32 (batch on sublanes, straight from HBM).
    # Cast to bf16 in VMEM; compute units have huge slack so this is free.
    xb = x_ref[...].astype(jnp.bfloat16)

    # fc1: contract on D without materializing a transpose:
    #   [64, D] . [TILE_B, D]^T -> [64, TILE_B]   (batch lands on the lane axis)
    h1 = lax.dot_general(w1_ref[...], xb, (((1,), (1,)), ((), ())),
                         preferred_element_type=jnp.float32)
    h1 = jnp.maximum(h1 + b1_ref[...], 0.0)
    # dropout(p=0.2) -> identity at inference

    # fc2: [32, 64] @ [64, TILE_B] -> [32, TILE_B]
    h2 = jnp.dot(w2_ref[...], h1.astype(jnp.bfloat16),
                 preferred_element_type=jnp.float32)
    h2 = jnp.maximum(h2 + b2_ref[...], 0.0)
    # dropout(p=0.2) -> identity at inference

    # fc3: [1, 32] @ [32, TILE_B] -> [1, TILE_B]  (lane-dense output)
    out = jnp.dot(w3_ref[...], h2.astype(jnp.bfloat16),
                  preferred_element_type=jnp.float32)
    o_ref[...] = (out + b3_ref[0, 0]).astype(o_ref.dtype)


def mlp_forward(x, params, max_tile_b=16384):
    """x: [B, D] float32 (fed to the kernel unmodified).  params in PyTorch
    nn.Linear layout (w: [out, in], b: [out]).  Returns [B, 1] float32."""
    B, D = x.shape

    # Weights -> bf16 (tiny, VMEM-resident across the whole grid); biases f32.
    w1 = params["w1"].astype(jnp.bfloat16)                  # [64, D]
    w2 = params["w2"].astype(jnp.bfloat16)                  # [32, 64]
    w3 = params["w3"].astype(jnp.bfloat16)                  # [1, 32]
    b1 = params["b1"].reshape(-1, 1).astype(jnp.float32)    # [64, 1]
    b2 = params["b2"].reshape(-1, 1).astype(jnp.float32)    # [32, 1]
    b3 = params["b3"].reshape(1, 1).astype(jnp.float32)     # [1, 1] -> SMEM

    # --- batch tiling ------------------------------------------------------
    if B <= 512:
        # Small batch: single grid step (block == full array, any B allowed).
        tile_b = B
    else:
        # Split into >= 2 steps (feeds both TensorCores on v7x) with large,
        # 128-aligned tiles so per-step DMA dwarfs the ~0.35us step overhead.
        tile_b = min(max_tile_b, pl.cdiv(pl.cdiv(B, 2), 128) * 128)
    grid_b = pl.cdiv(B, tile_b)
    b_pad = grid_b * tile_b   # output slab width; input x is NOT padded.

    def resident(arr):
        # Whole (tiny) array as one block, same block every grid step
        # -> stays VMEM-resident, no re-DMA per iteration.
        return pl.BlockSpec(arr.shape, lambda i: (0,) * arr.ndim)

    out = pl.pallas_call(
        mlp_kernel,
        out_shape=jax.ShapeDtypeStruct((1, b_pad), jnp.float32),
        grid=(grid_b,),
        in_specs=[
            # x batch-tiled; a partial last block reads unspecified rows which
            # only affect the padded (later sliced-off) output columns.
            pl.BlockSpec((tile_b, D), lambda i: (i, 0)),
            resident(w1), resident(b1),
            resident(w2), resident(b2),
            resident(w3),
            pl.BlockSpec(memory_space=pltpu.MemorySpace.SMEM),   # b3 scalar
        ],
        out_specs=pl.BlockSpec((1, tile_b), lambda i: (0, i)),
        compiler_params=pltpu.CompilerParams(
            dimension_semantics=("parallel",)),
    )(x, w1, b1, w2, b2, w3, b3)

    return out[:, :B].T  # [B, 1]


def mlp_reference(x, params):
    """Plain-JAX reference mirroring the kernel's bf16 inputs / f32 accum."""
    bf16, f32 = jnp.bfloat16, jnp.float32
    w1 = params["w1"].astype(bf16)
    w2 = params["w2"].astype(bf16)
    w3 = params["w3"].astype(bf16)
    h1 = jnp.dot(x.astype(bf16), w1.T, preferred_element_type=f32) + params["b1"]
    h1 = jnp.maximum(h1, 0.0)
    h2 = jnp.dot(h1.astype(bf16), w2.T, preferred_element_type=f32) + params["b2"]
    h2 = jnp.maximum(h2, 0.0)
    return jnp.dot(h2.astype(bf16), w3.T, preferred_element_type=f32) + params["b3"]


def init_params(key, in_features):
    """Deterministic init mimicking nn.Linear default (uniform +/- 1/sqrt(fan_in)),
    stored in PyTorch layout: w [out, in], b [out]."""
    dims = [(in_features, 64), (64, 32), (32, 1)]
    params = {}
    for i, (fan_in, fan_out) in enumerate(dims, start=1):
        key, kw, kb = jax.random.split(key, 3)
        bound = 1.0 / jnp.sqrt(jnp.float32(fan_in))
        params[f"w{i}"] = jax.random.uniform(
            kw, (fan_out, fan_in), jnp.float32, -bound, bound)
        params[f"b{i}"] = jax.random.uniform(
            kb, (fan_out,), jnp.float32, -bound, bound)
    return params


if __name__ == "__main__":
    key = jax.random.PRNGKey(0)
    k_x, k_p = jax.random.split(key)

    B, D = 8, 16  # small batch; X_train.shape[1] = 16 features
    x = jax.random.normal(k_x, (B, D), jnp.float32)
    params = init_params(k_p, D)

    out = jax.block_until_ready(mlp_forward(x, params))
    ref = mlp_reference(x, params)
    assert out.shape == (B, 1)
    assert jnp.allclose(out, ref, atol=2e-3, rtol=2e-3), \
        float(jnp.max(jnp.abs(out - ref)))

    # Exercise the multi-tile grid + partial last block (B not a tile multiple).
    B2 = 700
    x2 = jax.random.normal(jax.random.PRNGKey(1), (B2, D), jnp.float32)
    out2 = jax.block_until_ready(mlp_forward(x2, params))
    ref2 = mlp_reference(x2, params)
    assert out2.shape == (B2, 1)
    assert jnp.allclose(out2, ref2, atol=2e-3, rtol=2e-3), \
        float(jnp.max(jnp.abs(out2 - ref2)))

    print("KERNEL_OK")
</pallas_src>

<mosaic_0001>
module attributes {stable_mosaic.version = 11 : i64} {
  func.func @mlp_kernel(%arg0: i32, %arg1: memref<8x16xf32, #tpu.memory_space<vmem>>, %arg2: memref<64x16xbf16, #tpu.memory_space<vmem>>, %arg3: memref<64x1xf32, #tpu.memory_space<vmem>>, %arg4: memref<32x64xbf16, #tpu.memory_space<vmem>>, %arg5: memref<32x1xf32, #tpu.memory_space<vmem>>, %arg6: memref<1x32xbf16, #tpu.memory_space<vmem>>, %arg7: memref<1x1xf32, #tpu.memory_space<smem>>, %arg8: memref<1x8xf32, #tpu.memory_space<vmem>>) attributes {dimension_semantics = [#tpu.dimension_semantics<parallel>], iteration_bounds = array<i64: 1>, scalar_prefetch = 0 : i64, scratch_operands = 0 : i64, tpu.core_type = #tpu.core_type<tc>, window_params = [{transform_indices = @transform_0, window_bounds = array<i64: 8, 16>}, {pipeline_mode = #tpu.pipeline_mode<synchronous>, transform_indices = @transform_1, window_bounds = array<i64: 64, 16>}, {pipeline_mode = #tpu.pipeline_mode<synchronous>, transform_indices = @transform_2, window_bounds = array<i64: 64, 1>}, {pipeline_mode = #tpu.pipeline_mode<synchronous>, transform_indices = @transform_3, window_bounds = array<i64: 32, 64>}, {pipeline_mode = #tpu.pipeline_mode<synchronous>, transform_indices = @transform_4, window_bounds = array<i64: 32, 1>}, {pipeline_mode = #tpu.pipeline_mode<synchronous>, transform_indices = @transform_5, window_bounds = array<i64: 1, 32>}, {transform_indices = @transform_6, window_bounds = array<i64: 1, 1>}, {transform_indices = @transform_7, window_bounds = array<i64: 1, 8>}]} {
    %c0 = arith.constant 0 : index
    %c0_0 = arith.constant 0 : index
    %0 = vector.load %arg1[%c0, %c0_0] : memref<8x16xf32, #tpu.memory_space<vmem>>, vector<8x16xf32>
    %1 = arith.truncf %0 : vector<8x16xf32> to vector<8x16xbf16>
    %c0_1 = arith.constant 0 : index
    %c0_2 = arith.constant 0 : index
    %2 = vector.load %arg2[%c0_1, %c0_2] : memref<64x16xbf16, #tpu.memory_space<vmem>>, vector<64x16xbf16>
    %cst = arith.constant dense<0.000000e+00> : vector<64x8xf32>
    %3 = tpu.matmul %2, %1, %cst {dimension_numbers = #tpu.dot_dimension_numbers<[1], [1], [0], [0], [0, 0, 1, 0], [], []>} : vector<64x16xbf16>, vector<8x16xbf16>, vector<64x8xf32> -> vector<64x8xf32>
    %c0_3 = arith.constant 0 : index
    %c0_4 = arith.constant 0 : index
    %4 = vector.load %arg3[%c0_3, %c0_4] : memref<64x1xf32, #tpu.memory_space<vmem>>, vector<64x1xf32>
    %5 = vector.broadcast %4 : vector<64x1xf32> to vector<64x8xf32>
    %6 = arith.addf %3, %5 : vector<64x8xf32>
    %cst_5 = arith.constant 0.000000e+00 : f32
    %7 = vector.broadcast %cst_5 : f32 to vector<64x8xf32>
    %8 = arith.maximumf %6, %7 : vector<64x8xf32>
    %c0_6 = arith.constant 0 : index
    %c0_7 = arith.constant 0 : index
    %9 = vector.load %arg4[%c0_6, %c0_7] : memref<32x64xbf16, #tpu.memory_space<vmem>>, vector<32x64xbf16>
    %10 = arith.truncf %8 : vector<64x8xf32> to vector<64x8xbf16>
    %cst_8 = arith.constant dense<0.000000e+00> : vector<32x8xf32>
    %11 = tpu.matmul %9, %10, %cst_8 {dimension_numbers = #tpu.dot_dimension_numbers<[1], [0], [0], [1], [0, 0, 1, 1], [], []>} : vector<32x64xbf16>, vector<64x8xbf16>, vector<32x8xf32> -> vector<32x8xf32>
    %c0_9 = arith.constant 0 : index
    %c0_10 = arith.constant 0 : index
    %12 = vector.load %arg5[%c0_9, %c0_10] : memref<32x1xf32, #tpu.memory_space<vmem>>, vector<32x1xf32>
    %13 = vector.broadcast %12 : vector<32x1xf32> to vector<32x8xf32>
    %14 = arith.addf %11, %13 : vector<32x8xf32>
    %cst_11 = arith.constant 0.000000e+00 : f32
    %15 = vector.broadcast %cst_11 : f32 to vector<32x8xf32>
    %16 = arith.maximumf %14, %15 : vector<32x8xf32>
    %c0_12 = arith.constant 0 : index
    %c0_13 = arith.constant 0 : index
    %17 = vector.load %arg6[%c0_12, %c0_13] : memref<1x32xbf16, #tpu.memory_space<vmem>>, vector<1x32xbf16>
    %18 = arith.truncf %16 : vector<32x8xf32> to vector<32x8xbf16>
    %cst_14 = arith.constant dense<0.000000e+00> : vector<1x8xf32>
    %19 = tpu.matmul %17, %18, %cst_14 {dimension_numbers = #tpu.dot_dimension_numbers<[1], [0], [0], [1], [0, 0, 1, 1], [], []>} : vector<1x32xbf16>, vector<32x8xbf16>, vector<1x8xf32> -> vector<1x8xf32>
    %c0_15 = arith.constant 0 : index
    %c0_16 = arith.constant 0 : index
    %20 = memref.load %arg7[%c0_15, %c0_16] : memref<1x1xf32, #tpu.memory_space<smem>>
    %21 = vector.broadcast %20 : f32 to vector<1x8xf32>
    %22 = arith.addf %19, %21 : vector<1x8xf32>
    %c0_17 = arith.constant 0 : index
    %c0_18 = arith.constant 0 : index
    %23 = vector.load %arg8[%c0_17, %c0_18] : memref<1x8xf32, #tpu.memory_space<vmem>>, vector<1x8xf32>
    tpu.vector_store %arg8[%c0_17, %c0_18], %22 {strides = array<i32>} : memref<1x8xf32, #tpu.memory_space<vmem>>, vector<1x8xf32>,
    return
  }
  func.func @transform_0(%arg0: i32) -> (i32, i32) {
    %c0_i32 = arith.constant 0 : i32
    %c0_i32_0 = arith.constant 0 : i32
    return %arg0, %c0_i32 : i32, i32
  }
  func.func @transform_1(%arg0: i32) -> (i32, i32) {
    %c0_i32 = arith.constant 0 : i32
    %c0_i32_0 = arith.constant 0 : i32
    %c0_i32_1 = arith.constant 0 : i32
    return %c0_i32, %c0_i32_0 : i32, i32
  }
  func.func @transform_2(%arg0: i32) -> (i32, i32) {
    %c0_i32 = arith.constant 0 : i32
    %c0_i32_0 = arith.constant 0 : i32
    %c0_i32_1 = arith.constant 0 : i32
    return %c0_i32, %c0_i32_0 : i32, i32
  }
  func.func @transform_3(%arg0: i32) -> (i32, i32) {
    %c0_i32 = arith.constant 0 : i32
    %c0_i32_0 = arith.constant 0 : i32
    %c0_i32_1 = arith.constant 0 : i32
    return %c0_i32, %c0_i32_0 : i32, i32
  }
  func.func @transform_4(%arg0: i32) -> (i32, i32) {
    %c0_i32 = arith.constant 0 : i32
    %c0_i32_0 = arith.constant 0 : i32
    %c0_i32_1 = arith.constant 0 : i32
    return %c0_i32, %c0_i32_0 : i32, i32
  }
  func.func @transform_5(%arg0: i32) -> (i32, i32) {
    %c0_i32 = arith.constant 0 : i32
    %c0_i32_0 = arith.constant 0 : i32
    %c0_i32_1 = arith.constant 0 : i32
    return %c0_i32, %c0_i32_0 : i32, i32
  }
  func.func @transform_6(%arg0: i32) -> (i32, i32) {
    %c0_i32 = arith.constant 0 : i32
    %c0_i32_0 = arith.constant 0 : i32
    %c0_i32_1 = arith.constant 0 : i32
    return %c0_i32, %c0_i32_0 : i32, i32
  }
  func.func @transform_7(%arg0: i32) -> (i32, i32) {
    %c0_i32 = arith.constant 0 : i32
    %c0_i32_0 = arith.constant 0 : i32
    return %c0_i32, %arg0 : i32, i32
  }
}

</mosaic_0001>

<llo_original>
// kernel: tpu_custom_call.1
$region0: #{tpu_custom_call.1}
  #allocation0 [shape = 'u32[]', space=smem, size = 0x4, offset = 0x4, fixed_abs, tag = 'smem constant byte address 0x4 - core index']
  #allocation1 [shape = 'u32[144,128]{1,0:T(1,128)}', space=vmem, size = 0x12000, scoped, tag = 'internal scratch']
  #allocation2 [shape = 'f32[1,1]{1,0:T(1,128)S(6)}', space=smem, size = 0x200, scoped, tag = 'scoped memory for tpu_custom_call.1']
  %s0 = inlined_call_operand.vmem [shape: f32[8,16], index: 0, kind: input, shape index: {}]
  %s1 = inlined_call_operand.vmem [shape: bf16[64,16], index: 1, kind: input, shape index: {}]
  %s2 = inlined_call_operand.vmem [shape: f32[64,1], index: 2, kind: input, shape index: {}]
  %s3 = inlined_call_operand.vmem [shape: bf16[32,64], index: 3, kind: input, shape index: {}]
  %s4 = inlined_call_operand.vmem [shape: f32[32,1], index: 4, kind: input, shape index: {}]
  %s5 = inlined_call_operand.vmem [shape: bf16[1,32], index: 5, kind: input, shape index: {}]
  %s6 = inlined_call_operand.<no memory space> [shape: f32[1,1], index: 6, kind: input, shape index: {}]
  %s7 = inlined_call_operand.hbm [shape: f32[1,8], index: 7, kind: output, shape index: {}]
  %s8 = sld [smem:[#allocation0]]
  $region38: #{tpu_custom_call.1} parent=0
    _
  %s10 = ssub.s32 1, %s8
  %s11 = scalar_select 0, %s10, %s8
  %12 = sst [smem:[#allocation2]] %s6
  $region1: #{tpu_custom_call.1} parent=0
    #allocation3 [shape = 'u8[512]{0}', space=vmem, size = 0x400, scoped, tag = 'output window, operand 0, single buffered']
    #allocation4 [shape = 's32[1]{0}', space=sflag, size = 0x4, scoped, tag = 'scoped memory for tpu_custom_call.1']
    %13 = vsyncpa [#allocation4], 0
    // Predicated region
    $region2: #{tpu_custom_call.1} parent=1 // pred_check
      _
    $region3: #{tpu_custom_call.1} parent=1 // pred_check_branch
      %15 = sbr.rel (0) target = $region5
    $region4: #{tpu_custom_call.1} parent=1 // pred_region
      _
    $region5: #{tpu_custom_call.1} parent=1 // pred_fallthru
      _
    // Predicated region
    $region6: #{tpu_custom_call.1} parent=1 // pred_check
      _
    $region7: #{tpu_custom_call.1} parent=1 // pred_check_branch
      %17 = sbr.rel (0) target = $region9
    $region8: #{tpu_custom_call.1} parent=1 // pred_region
      _
    $region9: #{tpu_custom_call.1} parent=1 // pred_fallthru
      _
    // Predicated region
    $region10: #{tpu_custom_call.1} parent=1 // pred_check
      _
    $region11: #{tpu_custom_call.1} parent=1 // pred_check_branch
      %19 = sbr.rel (0) target = $region13
    $region12: #{tpu_custom_call.1} parent=1 // pred_region
      _
    $region13: #{tpu_custom_call.1} parent=1 // pred_fallthru
      _
    // Predicated region
    $region14: #{tpu_custom_call.1} parent=1 // pred_check
      _
    $region15: #{tpu_custom_call.1} parent=1 // pred_check_branch
      %21 = sbr.rel (0) target = $region17
    $region16: #{tpu_custom_call.1} parent=1 // pred_region
      _
    $region17: #{tpu_custom_call.1} parent=1 // pred_fallthru
      _
    // Predicated region
    $region18: #{tpu_custom_call.1} parent=1 // pred_check
      _
    $region19: #{tpu_custom_call.1} parent=1 // pred_check_branch
      %23 = sbr.rel (0) target = $region21
    $region20: #{tpu_custom_call.1} parent=1 // pred_region
      _
    $region21: #{tpu_custom_call.1} parent=1 // pred_fallthru
      _
    // Predicated region
    $region22: #{tpu_custom_call.1} parent=1 // pred_check
      _
    $region23: #{tpu_custom_call.1} parent=1 // pred_check_branch
      %25 = sbr.rel (0) target = $region25
    $region24: #{tpu_custom_call.1} parent=1 // pred_region
      _
    $region25: #{tpu_custom_call.1} parent=1 // pred_fallthru
      _
    // Predicated region
    $region26: #{tpu_custom_call.1} parent=1 // pred_check
      _
    $region27: #{tpu_custom_call.1} parent=1 // pred_check_branch
      %27 = sbr.rel (0) target = $region29
    $region28: #{tpu_custom_call.1} parent=1 // pred_region
      _
    $region29: #{tpu_custom_call.1} parent=1 // pred_fallthru
      _
    %v29 = vld [vmem:[%s0] sm:$0xff]
    %v30 = vpack.c.bf16 %v29, %v29
    %v31 = vld [vmem:[%s1] sm:$0xf]
    %v32 = vld [vmem:[%s1 + $0x4] sm:$0xf]
    %v33 = vld [vmem:[%s1 + $0x8] sm:$0xf]
    %v34 = vld [vmem:[%s1 + $0xc] sm:$0xf]
    %v35 = vld [vmem:[%s1 + $0x10] sm:$0xf]
    %v36 = vld [vmem:[%s1 + $0x14] sm:$0xf]
    %v37 = vld [vmem:[%s1 + $0x18] sm:$0xf]
    %v38 = vld [vmem:[%s1 + $0x1c] sm:$0xf]
    %v39 = vld [vmem:[%s2] sm:$0xff]
    %v40 = vld [vmem:[%s2 + $0x8] sm:$0xff]
    %v41 = vld [vmem:[%s2 + $0x10] sm:$0xff]
    %v42 = vld [vmem:[%s2 + $0x18] sm:$0xff]
    %v43 = vld [vmem:[%s2 + $0x20] sm:$0xff]
    %v44 = vld [vmem:[%s2 + $0x28] sm:$0xff]
    %v45 = vld [vmem:[%s2 + $0x30] sm:$0xff]
    %v46 = vld [vmem:[%s2 + $0x38] sm:$0xff]
    %48 = vset.pattern.permute.xlu0 0
    %49 = vperm.xlu0 %48, %v39
    %v50 = vpop.permute.xlu0 %49
    %53 = vset.pattern.permute.xlu0 0
    %54 = vperm.xlu0 %53, %v40
    %v55 = vpop.permute.xlu0 %54
    %58 = vset.pattern.permute.xlu0 0
    %59 = vperm.xlu0 %58, %v41
    %v60 = vpop.permute.xlu0 %59
    %63 = vset.pattern.permute.xlu0 0
    %64 = vperm.xlu0 %63, %v42
    %v65 = vpop.permute.xlu0 %64
    %68 = vset.pattern.permute.xlu0 0
    %69 = vperm.xlu0 %68, %v43
    %v70 = vpop.permute.xlu0 %69
    %73 = vset.pattern.permute.xlu0 0
    %74 = vperm.xlu0 %73, %v44
    %v75 = vpop.permute.xlu0 %74
    %78 = vset.pattern.permute.xlu0 0
    %79 = vperm.xlu0 %78, %v45
    %v80 = vpop.permute.xlu0 %79
    %83 = vset.pattern.permute.xlu0 0
    %84 = vperm.xlu0 %83, %v46
    %v85 = vpop.permute.xlu0 %84
    %v95 = vunpack.c.l.b16 %v31
    %v96 = vunpack.c.l.b16 %v32
    %v97 = vunpack.c.l.b16 %v33
    %v98 = vunpack.c.l.b16 %v34
    %v99 = vunpack.c.l.b16 %v35
    %v100 = vunpack.c.l.b16 %v36
    %v101 = vunpack.c.l.b16 %v37
    %v102 = vunpack.c.l.b16 %v38
    %v103 = vpack.c.b16 %v96, %v95
    %v104 = vpack.c.b16 %v98, %v97
    %v105 = vpack.c.b16 %v100, %v99
    %v106 = vpack.c.b16 %v102, %v101
    %vm107 = vcmask 130048
    %v109 = vsel %vm107, %v103, 0
    %v112 = vsel %vm107, %v104, 0
    %v115 = vsel %vm107, %v105, 0
    %v118 = vsel %vm107, %v106, 0
    %v121 = vsel %vm107, %v30, 0
    %123 = vmatprep.subr.bf16.mxu0 0
    %124 = vmatpush1.bf16.xpose.msra.mxu0 %v121
    %125 = vmatprep.subr.bf16.mxu0 0
    %126 = vmatpush1.bf16.xpose.msra.mxu0 0
    %127 = vmatprep.subr.bf16.mxu0 0
    %128 = vmatpush1.bf16.xpose.msra.mxu0 0
    %129 = vmatprep.subr.bf16.mxu0 0
    %130 = vmatpush1.bf16.xpose.msra.mxu0 0
    %131 = vmatprep.subr.bf16.mxu0 0
    %132 = vmatpush1.bf16.xpose.msra.mxu0 0
    %133 = vmatprep.subr.bf16.mxu0 0
    %134 = vmatpush1.bf16.xpose.msra.mxu0 0
    %135 = vmatprep.subr.bf16.mxu0 0
    %136 = vmatpush1.bf16.xpose.msra.mxu0 0
    %137 = vmatprep.subr.bf16.mxu0 0
    %138 = vmatpush1.bf16.xpose.msra.mxu0 0
    %139 = vmatprep.subr.bf16.mxu0 0
    %140 = vmatpush1.bf16.xpose.msra.mxu0 0
    %141 = vmatprep.subr.bf16.mxu0 0
    %142 = vmatpush1.bf16.xpose.msra.mxu0 0
    %143 = vmatprep.subr.bf16.mxu0 0
    %144 = vmatpush1.bf16.xpose.msra.mxu0 0
    %145 = vmatprep.subr.bf16.mxu0 0
    %146 = vmatpush1.bf16.xpose.msra.mxu0 0
    %147 = vmatprep.subr.bf16.mxu0 0
    %148 = vmatpush1.bf16.xpose.msra.mxu0 0
    %149 = vmatprep.subr.bf16.mxu0 0
    %150 = vmatpush1.bf16.xpose.msra.mxu0 0
    %151 = vmatprep.subr.bf16.mxu0 0
    %152 = vmatpush1.bf16.xpose.msra.mxu0 0
    %153 = vmatprep.subr.bf16.mxu0 0
    %154 = vmatpush1.bf16.xpose.msra.mxu0 0
    %155 = vmatprep.mubr.bf16.mxu0 0
    %156 = vmatmul.mubr.bf16.gmra.mrb[0].mxu0 %v109
    %v157 = vpop.f32.mrb[0].mxu0
    %v158 = vadd.f32 %v50, %v157
    %v159 = vpop.f32.mrb[0].mxu0
    %v160 = vpop.f32.mrb[0].mxu0
    %v161 = vadd.f32 %v55, %v160
    %v162 = vpop.f32.mrb[0].mxu0
    %163 = vmatprep.mubr.bf16.mxu0 0
    %164 = vmatmul.mubr.bf16.gmra.mrb[0].mxu0 %v112
    %v165 = vpop.f32.mrb[0].mxu0
    %v166 = vadd.f32 %v60, %v165
    %v167 = vpop.f32.mrb[0].mxu0
    %v168 = vpop.f32.mrb[0].mxu0
    %v169 = vadd.f32 %v65, %v168
    %v170 = vpop.f32.mrb[0].mxu0
    %171 = vmatprep.mubr.bf16.mxu0 0
    %172 = vmatmul.mubr.bf16.gmra.mrb[0].mxu0 %v115
    %v173 = vpop.f32.mrb[0].mxu0
    %v174 = vadd.f32 %v70, %v173
    %v175 = vpop.f32.mrb[0].mxu0
    %v176 = vpop.f32.mrb[0].mxu0
    %v177 = vadd.f32 %v75, %v176
    %v178 = vpop.f32.mrb[0].mxu0
    %179 = vmatprep.mubr.bf16.mxu0 0
    %180 = vmatmul.mubr.bf16.gmra.mrb[0].mxu0 %v118
    %v181 = vpop.f32.mrb[0].mxu0
    %v182 = vadd.f32 %v80, %v181
    %v183 = vpop.f32.mrb[0].mxu0
    %v184 = vpop.f32.mrb[0].mxu0
    %v185 = vadd.f32 %v85, %v184
    %v186 = vpop.f32.mrb[0].mxu0
    %187 = vdwg.mxu0
    %v188 = vmax.f32 %v158, 0.0
    %v189 = vmax.f32 %v161, 0.0
    %v190 = vmax.f32 %v166, 0.0
    %v191 = vmax.f32 %v169, 0.0
    %v192 = vmax.f32 %v174, 0.0
    %v193 = vmax.f32 %v177, 0.0
    %v194 = vmax.f32 %v182, 0.0
    %v195 = vmax.f32 %v185, 0.0
    %v196 = vld [vmem:[%s3] sm:$0xf]
    %v197 = vld [vmem:[%s3 + $0x4] sm:$0xf]
    %v198 = vld [vmem:[%s3 + $0x8] sm:$0xf]
    %v199 = vld [vmem:[%s3 + $0xc] sm:$0xf]
    %v200 = vpack.c.bf16 %v189, %v188
    %v201 = vpack.c.bf16 %v191, %v190
    %v202 = vpack.c.bf16 %v193, %v192
    %v203 = vpack.c.bf16 %v195, %v194
    %v204 = vld [vmem:[%s4] sm:$0xff]
    %v205 = vld [vmem:[%s4 + $0x8] sm:$0xff]
    %v206 = vld [vmem:[%s4 + $0x10] sm:$0xff]
    %v207 = vld [vmem:[%s4 + $0x18] sm:$0xff]
    %209 = vset.pattern.permute.xlu0 0
    %210 = vperm.xlu0 %209, %v204
    %v211 = vpop.permute.xlu0 %210
    %214 = vset.pattern.permute.xlu0 0
    %215 = vperm.xlu0 %214, %v205
    %v216 = vpop.permute.xlu0 %215
    %219 = vset.pattern.permute.xlu0 0
    %220 = vperm.xlu0 %219, %v206
    %v221 = vpop.permute.xlu0 %220
    %224 = vset.pattern.permute.xlu0 0
    %225 = vperm.xlu0 %224, %v207
    %v226 = vpop.permute.xlu0 %225
    %v232 = vunpack.c.l.b16 %v196
    %v233 = vunpack.c.l.b16 %v197
    %v234 = vunpack.c.l.b16 %v198
    %v235 = vunpack.c.l.b16 %v199
    %v236 = vpack.c.b16 %v233, %v232
    %v237 = vpack.c.b16 %v235, %v234
    %vm238 = vcmask 523264
    %v240 = vsel %vm238, %v236, 0
    %v243 = vsel %vm238, %v237, 0
    %245 = vmatprep.subr.bf16.mxu0 0
    %246 = vmatpush1.bf16.msra.mxu0 %v200
    %247 = vmatprep.subr.bf16.mxu0 0
    %248 = vmatpush1.bf16.msra.mxu0 %v201
    %249 = vmatprep.subr.bf16.mxu0 0
    %250 = vmatpush1.bf16.msra.mxu0 %v202
    %251 = vmatprep.subr.bf16.mxu0 0
    %252 = vmatpush1.bf16.msra.mxu0 %v203
    %253 = vmatprep.subr.bf16.mxu0 0
    %254 = vmatpush1.bf16.msra.mxu0 0
    %255 = vmatprep.subr.bf16.mxu0 0
    %256 = vmatpush1.bf16.msra.mxu0 0
    %257 = vmatprep.subr.bf16.mxu0 0
    %258 = vmatpush1.bf16.msra.mxu0 0
    %259 = vmatprep.subr.bf16.mxu0 0
    %260 = vmatpush1.bf16.msra.mxu0 0
    %261 = vmatprep.subr.bf16.mxu0 0
    %262 = vmatpush1.bf16.msra.mxu0 0
    %263 = vmatprep.subr.bf16.mxu0 0
    %264 = vmatpush1.bf16.msra.mxu0 0
    %265 = vmatprep.subr.bf16.mxu0 0
    %266 = vmatpush1.bf16.msra.mxu0 0
    %267 = vmatprep.subr.bf16.mxu0 0
    %268 = vmatpush1.bf16.msra.mxu0 0
    %269 = vmatprep.subr.bf16.mxu0 0
    %270 = vmatpush1.bf16.msra.mxu0 0
    %271 = vmatprep.subr.bf16.mxu0 0
    %272 = vmatpush1.bf16.msra.mxu0 0
    %273 = vmatprep.subr.bf16.mxu0 0
    %274 = vmatpush1.bf16.msra.mxu0 0
    %275 = vmatprep.subr.bf16.mxu0 0
    %276 = vmatpush1.bf16.msra.mxu0 0
    %277 = vmatprep.mubr.bf16.mxu0 0
    %278 = vmatmul.mubr.bf16.gmra.mrb[0].mxu0 %v240
    %v279 = vpop.f32.mrb[0].mxu0
    %v280 = vadd.f32 %v211, %v279
    %v281 = vpop.f32.mrb[0].mxu0
    %v282 = vpop.f32.mrb[0].mxu0
    %v283 = vadd.f32 %v216, %v282
    %v284 = vpop.f32.mrb[0].mxu0
    %285 = vmatprep.mubr.bf16.mxu0 0
    %286 = vmatmul.mubr.bf16.gmra.mrb[0].mxu0 %v243
    %v287 = vpop.f32.mrb[0].mxu0
    %v288 = vadd.f32 %v221, %v287
    %v289 = vpop.f32.mrb[0].mxu0
    %v290 = vpop.f32.mrb[0].mxu0
    %v291 = vadd.f32 %v226, %v290
    %v292 = vpop.f32.mrb[0].mxu0
    %293 = vdwg.mxu0
    %v294 = vmax.f32 %v280, 0.0
    %v295 = vmax.f32 %v283, 0.0
    %v296 = vmax.f32 %v288, 0.0
    %v297 = vmax.f32 %v291, 0.0
    %v298 = vld [vmem:[%s5] sm:$0x1]
    %v299 = vpack.c.bf16 %v295, %v294
    %v300 = vpack.c.bf16 %v297, %v296
    %s301 = sld [smem:[#allocation2]]
    %v302 = vstv %s301
    %vm303 = vcmask 261120
    %v305 = vsel %vm303, %v298, 0
    %307 = vmatprep.subr.bf16.mxu0 0
    %308 = vmatpush1.bf16.msra.mxu0 %v299
    %309 = vmatprep.subr.bf16.mxu0 0
    %310 = vmatpush1.bf16.msra.mxu0 %v300
    %311 = vmatprep.subr.bf16.mxu0 0
    %312 = vmatpush1.bf16.msra.mxu0 0
    %313 = vmatprep.subr.bf16.mxu0 0
    %314 = vmatpush1.bf16.msra.mxu0 0
    %315 = vmatprep.subr.bf16.mxu0 0
    %316 = vmatpush1.bf16.msra.mxu0 0
    %317 = vmatprep.subr.bf16.mxu0 0
    %318 = vmatpush1.bf16.msra.mxu0 0
    %319 = vmatprep.subr.bf16.mxu0 0
    %320 = vmatpush1.bf16.msra.mxu0 0
    %321 = vmatprep.subr.bf16.mxu0 0
    %322 = vmatpush1.bf16.msra.mxu0 0
    %323 = vmatprep.subr.bf16.mxu0 0
    %324 = vmatpush1.bf16.msra.mxu0 0
    %325 = vmatprep.subr.bf16.mxu0 0
    %326 = vmatpush1.bf16.msra.mxu0 0
    %327 = vmatprep.subr.bf16.mxu0 0
    %328 = vmatpush1.bf16.msra.mxu0 0
    %329 = vmatprep.subr.bf16.mxu0 0
    %330 = vmatpush1.bf16.msra.mxu0 0
    %331 = vmatprep.subr.bf16.mxu0 0
    %332 = vmatpush1.bf16.msra.mxu0 0
    %333 = vmatprep.subr.bf16.mxu0 0
    %334 = vmatpush1.bf16.msra.mxu0 0
    %335 = vmatprep.subr.bf16.mxu0 0
    %336 = vmatpush1.bf16.msra.mxu0 0
    %337 = vmatprep.subr.bf16.mxu0 0
    %338 = vmatpush1.bf16.msra.mxu0 0
    %339 = vmatprep.mubr.bf16.mxu0 0
    %340 = vmatmul.mubr.bf16.gmra.mrb[0].mxu0 %v305
    %v341 = vpop.f32.mrb[0].mxu0
    %v342 = vadd.f32 %v302, %v341
    %v343 = vpop.f32.mrb[0].mxu0
    %v344 = vpop.f32.mrb[0].mxu0
    %v345 = vpop.f32.mrb[0].mxu0
    %346 = vdwg.mxu0
    %vm347 = vcmask 57344
    %348 = vst.msk [vmem:[#allocation3] sm:$0x1] %vm347, %v342
    // Predicated region
    $region30: #{tpu_custom_call.1} parent=1 // pred_check
      _
    $region31: #{tpu_custom_call.1} parent=1 // pred_check_branch
      %350 = sbr.rel (0) target = $region33
    $region32: #{tpu_custom_call.1} parent=1 // pred_region
      %s352 = ssub.s32 16, 16
      %353 = vsyncadd [#allocation4], %s352
      %s355 = sshll.u32 [#allocation3], 4
      %s356 = int_to_ptr.vmem [resolvable:$true] %s355
      %358 = dma.vmem_to_hbm [thread:$0]  %s356, 16, %s7, [#allocation4]
    $region33: #{tpu_custom_call.1} parent=1 // pred_fallthru
      _
    // Predicated region
    $region34: #{tpu_custom_call.1} parent=1 // pred_check
      _
    $region35: #{tpu_custom_call.1} parent=1 // pred_check_branch
      %360 = sbr.rel (0) target = $region37
    $region36: #{tpu_custom_call.1} parent=1 // pred_region
      %361 = dma.done [#allocation4], 16
    $region37: #{tpu_custom_call.1} parent=1 // pred_fallthru
      _
    %362 = vsyncpa [#allocation4], 1

</llo_original>
